<compile_context>
chip_gen: v5e
topology: v5e:2x2
jax: 0.10.0
libtpu: 0.0.40
codegen_flags: <defaults>
</compile_context>

<pallas_src>
import functools

import jax
import jax.numpy as jnp
from jax.experimental import pallas as pl
from jax.experimental.pallas import tpu as pltpu

EPS = 1e-5
_TAPS = tuple((oy, ox) for oy in (-1, 0, 1) for ox in (-1, 0, 1))  # ky-major order


def _round_up(x, m):
    return (x + m - 1) // m * m


def _sublane_pack(dtype):
    # 8 sublanes of 32-bit -> 8 rows for f32, 16 for bf16.
    return 8 * 4 // jnp.dtype(dtype).itemsize


# ---------------------------------------------------------------------------
# Host-side prep
# ---------------------------------------------------------------------------
def _tap_masks(H, W, dtype):
    """(16, H*W) 0/1 validity masks, one row per 3x3 tap (rows 9..15 are pad)."""
    HW = H * W
    r = jnp.arange(HW, dtype=jnp.int32) // W
    c = jnp.arange(HW, dtype=jnp.int32) % W
    rows = []
    for oy, ox in _TAPS:
        rows.append((r + oy >= 0) & (r + oy < H) & (c + ox >= 0) & (c + ox < W))
    m = jnp.stack(rows).astype(dtype)                      # (9, HW)
    pad = _round_up(m.shape[0], 8) - m.shape[0]
    if pad:
        m = jnp.concatenate([m, jnp.zeros((pad, HW), dtype)], axis=0)
    return m                                               # (16, HW)


def _prep_weight(w_hwio, cpad, dtype):
    """HWIO (3,3,Cin,Cout) -> (Cout, 9*cpad), tap-major rows, zero pad columns."""
    kh, kw, cin, cout = w_hwio.shape
    w = jnp.transpose(w_hwio, (3, 0, 1, 2)).reshape(cout, kh * kw, cin)
    if cpad > cin:
        w = jnp.pad(w, ((0, 0), (0, 0), (0, cpad - cin)))
    return w.reshape(cout, kh * kw * cpad).astype(dtype)


def _scale_bias(partial_stats, gamma, beta, count):
    """Fold per-tile (sum, sum_sq) into per-channel BN scale/bias (f32).

    Note: E[x^2] - mean^2 can cancel for |mean| >> std; acceptable here because
    the conv outputs are near zero-mean.  TODO(synk): Welford-style combine of
    the per-tile partials for extreme activation statistics.
    """
    s = jnp.sum(partial_stats, axis=0)                     # (Cout, 2)
    mean = s[:, 0] / count
    var = jnp.maximum(s[:, 1] / count - mean * mean, 0.0)  # biased variance (torch BN)
    scale = gamma * jax.lax.rsqrt(var + EPS)
    bias = beta - mean * scale
    return scale, bias


# ---------------------------------------------------------------------------
# Kernels
# ---------------------------------------------------------------------------
def _conv_tile(xp_ref, col_ref, m_ref, w_ref, W):
    """im2col of the (Cpad, HW) image in xp_ref into col_ref, then one MXU matmul."""
    xp = xp_ref[...]                                       # single load, MXU dtype
    cpad, HW = xp.shape
    for t, (oy, ox) in enumerate(_TAPS):
        d = oy * W + ox                                    # flat lane offset of this tap
        if d == 0:
            sh = xp
        elif d > 0:                                        # left shift, zero-fill tail
            sh = jnp.concatenate([xp[:, d:], jnp.zeros((cpad, d), xp.dtype)], axis=1)
        else:                                              # right shift, zero-fill head
            sh = jnp.concatenate([jnp.zeros((cpad, -d), xp.dtype), xp[:, :HW + d]], axis=1)
        # tile-aligned (Cpad, HW) store; mask row broadcast over channels
        col_ref[pl.ds(t * cpad, cpad), :] = sh * m_ref[pl.ds(t, 1), :]
    return jnp.dot(w_ref[...], col_ref[...], preferred_element_type=jnp.float32)


def _conv_stats_kernel(x_ref, m_ref, w_ref, y_ref, st_ref, xp_ref, col_ref, *, cin, W):
    # x_ref: (TB, Cin, HW) f32   m_ref: (16, HW)   w_ref: (Cout, 9*Cpad)
    # y_ref: (TB, Cout, HW)      st_ref: (1, Cout, 2) f32
    # xp_ref: (Cpad, HW)         col_ref: (9*Cpad, HW)
    tb = x_ref.shape[0]
    HW = x_ref.shape[2]
    cout = y_ref.shape[1]
    cpad = xp_ref.shape[0]
    if cpad > cin:  # zero channel-pad rows once per grid step
        xp_ref[pl.ds(cin, cpad - cin), :] = jnp.zeros((cpad - cin, HW), xp_ref.dtype)
    s = jnp.zeros((cout, 1), jnp.float32)
    sq = jnp.zeros((cout, 1), jnp.float32)
    for b in range(tb):
        xp_ref[pl.ds(0, cin), :] = x_ref[b].astype(xp_ref.dtype)  # single hoisted cast
        y = _conv_tile(xp_ref, col_ref, m_ref, w_ref, W)          # f32 (Cout, HW)
        y_ref[b] = y.astype(y_ref.dtype)                          # bf16 HBM writeback ok
        s = s + jnp.sum(y, axis=-1, keepdims=True)                # stats from f32 y
        sq = sq + jnp.sum(y * y, axis=-1, keepdims=True)
    st_ref[0] = jnp.concatenate([s, sq], axis=-1)


def _bn_relu_conv_stats_kernel(y1_ref, sc_ref, bi_ref, m_ref, w_ref, y_ref, st_ref,
                               xp_ref, col_ref, *, cin, W):
    # y1_ref: (TB, Cout, HW)   sc/bi: (Cout, 1) f32   w_ref: (Cout, 9*Cpad)
    tb = y1_ref.shape[0]
    HW = y1_ref.shape[2]
    cout = y_ref.shape[1]
    cpad = xp_ref.shape[0]
    if cpad > cin:
        xp_ref[pl.ds(cin, cpad - cin), :] = jnp.zeros((cpad - cin, HW), xp_ref.dtype)
    sc = sc_ref[...]
    bi = bi_ref[...]
    s = jnp.zeros((cout, 1), jnp.float32)
    sq = jnp.zeros((cout, 1), jnp.float32)
    for b in range(tb):
        h = jnp.maximum(y1_ref[b].astype(jnp.float32) * sc + bi, 0.0)  # fused BN+ReLU (f32)
        xp_ref[pl.ds(0, cin), :] = h.astype(xp_ref.dtype)
        y = _conv_tile(xp_ref, col_ref, m_ref, w_ref, W)
        y_ref[b] = y.astype(y_ref.dtype)
        s = s + jnp.sum(y, axis=-1, keepdims=True)
        sq = sq + jnp.sum(y * y, axis=-1, keepdims=True)
    st_ref[0] = jnp.concatenate([s, sq], axis=-1)


def _bn_relu_kernel(y_ref, sc_ref, bi_ref, o_ref):
    # y_ref: (TB, Cout, HW)  sc/bi: (1, Cout, 1) f32  o_ref: (TB, Cout, HW) f32
    o_ref[...] = jnp.maximum(y_ref[...].astype(jnp.float32) * sc_ref[...] + bi_ref[...], 0.0)


# ---------------------------------------------------------------------------
# Wrapper
# ---------------------------------------------------------------------------
def basic_block_pallas(x_nchw, params, *, batch_tile=None, mxu_dtype=jnp.bfloat16):
    """BasicBlock forward (stride=1): x (N, Cin, H, W) f32 -> (N, Cout, H, W) f32.

    mxu_dtype: dtype of the MXU operands AND of the intermediate activations
    stored in HBM between passes (bfloat16 recommended on v6e/v7x; use float32
    on v5e or when un-quantized activations are required).  All elementwise
    math, accumulation and BN statistics stay float32.
    """
    N, Cin, H, W = x_nchw.shape
    Cout = params["w1"].shape[-1]
    HW = H * W

    act_dtype = mxu_dtype                    # intermediate y1/y2 HBM dtype
    mb = jnp.dtype(mxu_dtype).itemsize
    ab = jnp.dtype(act_dtype).itemsize
    pack = _sublane_pack(mxu_dtype)
    cpad1 = _round_up(Cin, pack)
    cpad2 = _round_up(Cout, pack)

    # ---- batch tile: >=2 grid steps when possible (v7x megacore), fit VMEM ----
    def per_step_bytes(tb):
        mask_b = 2 * 16 * HW * mb
        p1 = (2 * (tb * Cin * HW * 4 + tb * Cout * HW * ab + Cout * 2 * 4
                   + Cout * 9 * cpad1 * mb)
              + mask_b + (cpad1 + 9 * cpad1) * HW * mb)
        p2 = (2 * (2 * tb * Cout * HW * ab + 2 * Cout * 4 + Cout * 2 * 4
                   + Cout * 9 * cpad2 * mb)
              + mask_b + (cpad2 + 9 * cpad2) * HW * mb)
        p3 = 2 * (tb * Cout * HW * ab + tb * Cout * HW * 4 + 2 * Cout * 4)
        return max(p1, p2, p3)

    budget = 24 << 20                                   # headroom under v7x's 64 MiB VMEM
    req = max(1, min(batch_tile if batch_tile is not None else min(N, 8), N))
    divisors = [d for d in range(1, N + 1) if N % d == 0]
    cands = [d for d in divisors if d <= req and per_step_bytes(d) <= budget] or [1]
    multi = [d for d in cands if N // d >= 2]           # prefer >=2 grid steps
    tb = max(multi) if multi else max(cands)
    nblk = N // tb

    vmem_limit = int(min(max(2 * per_step_bytes(tb), 32 << 20), 48 << 20))
    cparams = pltpu.CompilerParams(dimension_semantics=("parallel",),
                                   vmem_limit_bytes=vmem_limit)

    x = x_nchw.reshape(N, Cin, HW)                      # free reshape (contiguous)
    masks = _tap_masks(H, W, mxu_dtype)                 # (16, HW), VMEM-resident
    w1 = _prep_weight(params["w1"], cpad1, mxu_dtype)   # (Cout, 9*cpad1)
    w2 = _prep_weight(params["w2"], cpad2, mxu_dtype)   # (Cout, 9*cpad2)

    tile3 = lambda i: (i, 0, 0)
    rep2 = lambda i: (0, 0)
    rep3 = lambda i: (0, 0, 0)

    # ---- pass 1: conv1 + per-tile per-channel (sum, sum_sq) ----
    y1, st1 = pl.pallas_call(
        functools.partial(_conv_stats_kernel, cin=Cin, W=W),
        grid=(nblk,),
        in_specs=[
            pl.BlockSpec((tb, Cin, HW), tile3),
            pl.BlockSpec(masks.shape, rep2),
            pl.BlockSpec(w1.shape, rep2),
        ],
        out_specs=[
            pl.BlockSpec((tb, Cout, HW), tile3),
            pl.BlockSpec((1, Cout, 2), tile3),
        ],
        out_shape=[
            jax.ShapeDtypeStruct((N, Cout, HW), act_dtype),
            jax.ShapeDtypeStruct((nblk, Cout, 2), jnp.float32),
        ],
        scratch_shapes=[pltpu.VMEM((cpad1, HW), mxu_dtype),
                        pltpu.VMEM((9 * cpad1, HW), mxu_dtype)],
        compiler_params=cparams,
    )(x, masks, w1)

    sc1, bi1 = _scale_bias(st1, params["g1"], params["b1"], N * HW)

    # ---- pass 2: bn1 + relu + conv2 + per-tile stats ----
    y2, st2 = pl.pallas_call(
        functools.partial(_bn_relu_conv_stats_kernel, cin=Cout, W=W),
        grid=(nblk,),
        in_specs=[
            pl.BlockSpec((tb, Cout, HW), tile3),
            pl.BlockSpec((Cout, 1), rep2),
            pl.BlockSpec((Cout, 1), rep2),
            pl.BlockSpec(masks.shape, rep2),
            pl.BlockSpec(w2.shape, rep2),
        ],
        out_specs=[
            pl.BlockSpec((tb, Cout, HW), tile3),
            pl.BlockSpec((1, Cout, 2), tile3),
        ],
        out_shape=[
            jax.ShapeDtypeStruct((N, Cout, HW), act_dtype),
            jax.ShapeDtypeStruct((nblk, Cout, 2), jnp.float32),
        ],
        scratch_shapes=[pltpu.VMEM((cpad2, HW), mxu_dtype),
                        pltpu.VMEM((9 * cpad2, HW), mxu_dtype)],
        compiler_params=cparams,
    )(y1, sc1.reshape(Cout, 1), bi1.reshape(Cout, 1), masks, w2)

    sc2, bi2 = _scale_bias(st2, params["g2"], params["b2"], N * HW)

    # ---- pass 3: bn2 + relu (pure elementwise; could be fused downstream) ----
    out = pl.pallas_call(
        _bn_relu_kernel,
        grid=(nblk,),
        in_specs=[
            pl.BlockSpec((tb, Cout, HW), tile3),
            pl.BlockSpec((1, Cout, 1), rep3),
            pl.BlockSpec((1, Cout, 1), rep3),
        ],
        out_specs=pl.BlockSpec((tb, Cout, HW), tile3),
        out_shape=jax.ShapeDtypeStruct((N, Cout, HW), jnp.float32),
        compiler_params=cparams,
    )(y2, sc2.reshape(1, Cout, 1), bi2.reshape(1, Cout, 1))

    return out.reshape(N, Cout, H, W)                   # free reshape back to NCHW


# ---------------------------------------------------------------------------
# Reference + demo
# ---------------------------------------------------------------------------
def basic_block_reference(x_nchw, params):
    """Plain-JAX reference of the same forward pass (training-mode BN stats)."""
    x = jnp.transpose(x_nchw, (0, 2, 3, 1))

    def conv(y, w):
        return jax.lax.conv_general_dilated(
            y, w, window_strides=(1, 1), padding="SAME",
            dimension_numbers=("NHWC", "HWIO", "NHWC"))

    def bn_relu(y, g, b):
        m = jnp.mean(y, axis=(0, 1, 2), keepdims=True)
        v = jnp.mean((y - m) ** 2, axis=(0, 1, 2), keepdims=True)
        y = (y - m) * jax.lax.rsqrt(v + EPS) * g.reshape(1, 1, 1, -1) + b.reshape(1, 1, 1, -1)
        return jnp.maximum(y, 0.0)

    y = bn_relu(conv(x, params["w1"]), params["g1"], params["b1"])
    y = bn_relu(conv(y, params["w2"]), params["g2"], params["b2"])
    return jnp.transpose(y, (0, 3, 1, 2))


def init_params(key, in_channels, out_channels):
    k1, k2, k3, k4, k5, k6 = jax.random.split(key, 6)
    return {
        "w1": 0.1 * jax.random.normal(k1, (3, 3, in_channels, out_channels), jnp.float32),
        "g1": 1.0 + 0.1 * jax.random.normal(k2, (out_channels,), jnp.float32),
        "b1": 0.1 * jax.random.normal(k3, (out_channels,), jnp.float32),
        "w2": 0.1 * jax.random.normal(k4, (3, 3, out_channels, out_channels), jnp.float32),
        "g2": 1.0 + 0.1 * jax.random.normal(k5, (out_channels,), jnp.float32),
        "b2": 0.1 * jax.random.normal(k6, (out_channels,), jnp.float32),
    }


if __name__ == "__main__":
    key = jax.random.PRNGKey(0)
    kx, kp = jax.random.split(key)

    N, Cin, H, W = 2, 4, 16, 16      # NCHW, like PyTorch
    Cout = 8                          # BasicBlock(in_channels=4, ..., out_channels=8)

    x = jax.random.normal(kx, (N, Cin, H, W), jnp.float32)
    params = init_params(kp, Cin, Cout)

    ref = jax.block_until_ready(basic_block_reference(x, params))

    # f32 MXU operands / f32 intermediates (v5e-safe path).
    out = jax.block_until_ready(basic_block_pallas(x, params, mxu_dtype=jnp.float32))
    assert out.shape == (N, Cout, H, W), out.shape
    err = float(jnp.max(jnp.abs(out - ref)))
    assert jnp.allclose(out, ref, rtol=1e-2, atol=1e-2), err

    # bf16 MXU operands + bf16 intermediates (recommended on v6e/v7x);
    # note this quantizes the activations, not just the weights.
    out_bf16 = jax.block_until_ready(basic_block_pallas(x, params, mxu_dtype=jnp.bfloat16))
    err_bf16 = float(jnp.max(jnp.abs(out_bf16 - ref)))
    assert jnp.allclose(out_bf16, ref, rtol=5e-2, atol=5e-2), err_bf16

    print("KERNEL_OK")
</pallas_src>

<mosaic_0001>
module attributes {stable_mosaic.version = 11 : i64} {
  func.func @_conv_stats_kernel(%arg0: i32, %arg1: memref<1x4x256xf32, #tpu.memory_space<vmem>>, %arg2: memref<16x256xf32, #tpu.memory_space<vmem>>, %arg3: memref<8x72xf32, #tpu.memory_space<vmem>>, %arg4: memref<1x8x256xf32, #tpu.memory_space<vmem>>, %arg5: memref<1x8x2xf32, #tpu.memory_space<vmem>>, %arg6: memref<8x256xf32, #tpu.memory_space<vmem>>, %arg7: memref<72x256xf32, #tpu.memory_space<vmem>>) attributes {dimension_semantics = [#tpu.dimension_semantics<parallel>], iteration_bounds = array<i64: 2>, scalar_prefetch = 0 : i64, scratch_operands = 2 : i64, tpu.core_type = #tpu.core_type<tc>, window_params = [{transform_indices = @transform_0, window_bounds = array<i64: 1, 4, 256>}, {pipeline_mode = #tpu.pipeline_mode<synchronous>, transform_indices = @transform_1, window_bounds = array<i64: 16, 256>}, {pipeline_mode = #tpu.pipeline_mode<synchronous>, transform_indices = @transform_2, window_bounds = array<i64: 8, 72>}, {transform_indices = @transform_3, window_bounds = array<i64: 1, 8, 256>}, {transform_indices = @transform_4, window_bounds = array<i64: 1, 8, 2>}]} {
    %cst = arith.constant 0.000000e+00 : f32
    %0 = vector.broadcast %cst : f32 to vector<4x256xf32>
    %c4 = arith.constant 4 : index
    %c0 = arith.constant 0 : index
    %1 = vector.load %arg6[%c4, %c0] : memref<8x256xf32, #tpu.memory_space<vmem>>, vector<4x256xf32>
    tpu.vector_store %arg6[%c4, %c0], %0 {strides = array<i32>} : memref<8x256xf32, #tpu.memory_space<vmem>>, vector<4x256xf32>,
    %cst_0 = arith.constant 0.000000e+00 : f32
    %2 = vector.broadcast %cst_0 : f32 to vector<8x1xf32>
    %cst_1 = arith.constant 0.000000e+00 : f32
    %3 = vector.broadcast %cst_1 : f32 to vector<8x1xf32>
    %c0_2 = arith.constant 0 : index
    %c0_3 = arith.constant 0 : index
    %c0_4 = arith.constant 0 : index
    %4 = vector.load %arg1[%c0_2, %c0_3, %c0_4] : memref<1x4x256xf32, #tpu.memory_space<vmem>>, vector<1x4x256xf32>
    %5 = vector.shape_cast %4 : vector<1x4x256xf32> to vector<4x256xf32>
    %c0_5 = arith.constant 0 : index
    %c0_6 = arith.constant 0 : index
    %6 = vector.load %arg6[%c0_5, %c0_6] : memref<8x256xf32, #tpu.memory_space<vmem>>, vector<4x256xf32>
    tpu.vector_store %arg6[%c0_5, %c0_6], %5 {strides = array<i32>} : memref<8x256xf32, #tpu.memory_space<vmem>>, vector<4x256xf32>,
    %c0_7 = arith.constant 0 : index
    %c0_8 = arith.constant 0 : index
    %7 = vector.load %arg6[%c0_7, %c0_8] : memref<8x256xf32, #tpu.memory_space<vmem>>, vector<8x256xf32>
    %cst_9 = arith.constant 0.000000e+00 : f32
    %8 = vector.broadcast %cst_9 : f32 to vector<8x17xf32>
    %9 = vector.extract_strided_slice %7 {offsets = [0, 0], sizes = [8, 239], strides = [1, 1]} : vector<8x256xf32> to vector<8x239xf32>
    %10 = tpu.concatenate %8, %9 in 1 : vector<8x17xf32>, vector<8x239xf32> -> vector<8x256xf32>
    %c0_10 = arith.constant 0 : index
    %c0_11 = arith.constant 0 : index
    %11 = vector.load %arg2[%c0_10, %c0_11] : memref<16x256xf32, #tpu.memory_space<vmem>>, vector<1x256xf32>
    %12 = vector.broadcast %11 : vector<1x256xf32> to vector<8x256xf32>
    %13 = arith.mulf %10, %12 : vector<8x256xf32>
    %c0_12 = arith.constant 0 : index
    %c0_13 = arith.constant 0 : index
    %14 = vector.load %arg7[%c0_12, %c0_13] : memref<72x256xf32, #tpu.memory_space<vmem>>, vector<8x256xf32>
    tpu.vector_store %arg7[%c0_12, %c0_13], %13 {strides = array<i32>} : memref<72x256xf32, #tpu.memory_space<vmem>>, vector<8x256xf32>,
    %cst_14 = arith.constant 0.000000e+00 : f32
    %15 = vector.broadcast %cst_14 : f32 to vector<8x16xf32>
    %16 = vector.extract_strided_slice %7 {offsets = [0, 0], sizes = [8, 240], strides = [1, 1]} : vector<8x256xf32> to vector<8x240xf32>
    %17 = tpu.concatenate %15, %16 in 1 : vector<8x16xf32>, vector<8x240xf32> -> vector<8x256xf32>
    %c1 = arith.constant 1 : index
    %c0_15 = arith.constant 0 : index
    %18 = vector.load %arg2[%c1, %c0_15] : memref<16x256xf32, #tpu.memory_space<vmem>>, vector<1x256xf32>
    %19 = vector.broadcast %18 : vector<1x256xf32> to vector<8x256xf32>
    %20 = arith.mulf %17, %19 : vector<8x256xf32>
    %c8 = arith.constant 8 : index
    %c0_16 = arith.constant 0 : index
    %21 = vector.load %arg7[%c8, %c0_16] : memref<72x256xf32, #tpu.memory_space<vmem>>, vector<8x256xf32>
    tpu.vector_store %arg7[%c8, %c0_16], %20 {strides = array<i32>} : memref<72x256xf32, #tpu.memory_space<vmem>>, vector<8x256xf32>,
    %cst_17 = arith.constant 0.000000e+00 : f32
    %22 = vector.broadcast %cst_17 : f32 to vector<8x15xf32>
    %23 = vector.extract_strided_slice %7 {offsets = [0, 0], sizes = [8, 241], strides = [1, 1]} : vector<8x256xf32> to vector<8x241xf32>
    %24 = tpu.concatenate %22, %23 in 1 : vector<8x15xf32>, vector<8x241xf32> -> vector<8x256xf32>
    %c2 = arith.constant 2 : index
    %c0_18 = arith.constant 0 : index
    %25 = vector.load %arg2[%c2, %c0_18] : memref<16x256xf32, #tpu.memory_space<vmem>>, vector<1x256xf32>
    %26 = vector.broadcast %25 : vector<1x256xf32> to vector<8x256xf32>
    %27 = arith.mulf %24, %26 : vector<8x256xf32>
    %c16 = arith.constant 16 : index
    %c0_19 = arith.constant 0 : index
    %28 = vector.load %arg7[%c16, %c0_19] : memref<72x256xf32, #tpu.memory_space<vmem>>, vector<8x256xf32>
    tpu.vector_store %arg7[%c16, %c0_19], %27 {strides = array<i32>} : memref<72x256xf32, #tpu.memory_space<vmem>>, vector<8x256xf32>,
    %cst_20 = arith.constant 0.000000e+00 : f32
    %29 = vector.broadcast %cst_20 : f32 to vector<8x1xf32>
    %30 = vector.extract_strided_slice %7 {offsets = [0, 0], sizes = [8, 255], strides = [1, 1]} : vector<8x256xf32> to vector<8x255xf32>
    %31 = tpu.concatenate %29, %30 in 1 : vector<8x1xf32>, vector<8x255xf32> -> vector<8x256xf32>
    %c3 = arith.constant 3 : index
    %c0_21 = arith.constant 0 : index
    %32 = vector.load %arg2[%c3, %c0_21] : memref<16x256xf32, #tpu.memory_space<vmem>>, vector<1x256xf32>
    %33 = vector.broadcast %32 : vector<1x256xf32> to vector<8x256xf32>
    %34 = arith.mulf %31, %33 : vector<8x256xf32>
    %c24 = arith.constant 24 : index
    %c0_22 = arith.constant 0 : index
    %35 = vector.load %arg7[%c24, %c0_22] : memref<72x256xf32, #tpu.memory_space<vmem>>, vector<8x256xf32>
    tpu.vector_store %arg7[%c24, %c0_22], %34 {strides = array<i32>} : memref<72x256xf32, #tpu.memory_space<vmem>>, vector<8x256xf32>,
    %c4_23 = arith.constant 4 : index
    %c0_24 = arith.constant 0 : index
    %36 = vector.load %arg2[%c4_23, %c0_24] : memref<16x256xf32, #tpu.memory_space<vmem>>, vector<1x256xf32>
    %37 = vector.broadcast %36 : vector<1x256xf32> to vector<8x256xf32>
    %38 = arith.mulf %7, %37 : vector<8x256xf32>
    %c32 = arith.constant 32 : index
    %c0_25 = arith.constant 0 : index
    %39 = vector.load %arg7[%c32, %c0_25] : memref<72x256xf32, #tpu.memory_space<vmem>>, vector<8x256xf32>
    tpu.vector_store %arg7[%c32, %c0_25], %38 {strides = array<i32>} : memref<72x256xf32, #tpu.memory_space<vmem>>, vector<8x256xf32>,
    %40 = vector.extract_strided_slice %7 {offsets = [0, 1], sizes = [8, 255], strides = [1, 1]} : vector<8x256xf32> to vector<8x255xf32>
    %cst_26 = arith.constant 0.000000e+00 : f32
    %41 = vector.broadcast %cst_26 : f32 to vector<8x1xf32>
    %42 = tpu.concatenate %40, %41 in 1 : vector<8x255xf32>, vector<8x1xf32> -> vector<8x256xf32>
    %c5 = arith.constant 5 : index
    %c0_27 = arith.constant 0 : index
    %43 = vector.load %arg2[%c5, %c0_27] : memref<16x256xf32, #tpu.memory_space<vmem>>, vector<1x256xf32>
    %44 = vector.broadcast %43 : vector<1x256xf32> to vector<8x256xf32>
    %45 = arith.mulf %42, %44 : vector<8x256xf32>
    %c40 = arith.constant 40 : index
    %c0_28 = arith.constant 0 : index
    %46 = vector.load %arg7[%c40, %c0_28] : memref<72x256xf32, #tpu.memory_space<vmem>>, vector<8x256xf32>
    tpu.vector_store %arg7[%c40, %c0_28], %45 {strides = array<i32>} : memref<72x256xf32, #tpu.memory_space<vmem>>, vector<8x256xf32>,
    %47 = vector.extract_strided_slice %7 {offsets = [0, 15], sizes = [8, 241], strides = [1, 1]} : vector<8x256xf32> to vector<8x241xf32>
    %cst_29 = arith.constant 0.000000e+00 : f32
    %48 = vector.broadcast %cst_29 : f32 to vector<8x15xf32>
    %49 = tpu.concatenate %47, %48 in 1 : vector<8x241xf32>, vector<8x15xf32> -> vector<8x256xf32>
    %c6 = arith.constant 6 : index
    %c0_30 = arith.constant 0 : index
    %50 = vector.load %arg2[%c6, %c0_30] : memref<16x256xf32, #tpu.memory_space<vmem>>, vector<1x256xf32>
    %51 = vector.broadcast %50 : vector<1x256xf32> to vector<8x256xf32>
    %52 = arith.mulf %49, %51 : vector<8x256xf32>
    %c48 = arith.constant 48 : index
    %c0_31 = arith.constant 0 : index
    %53 = vector.load %arg7[%c48, %c0_31] : memref<72x256xf32, #tpu.memory_space<vmem>>, vector<8x256xf32>
    tpu.vector_store %arg7[%c48, %c0_31], %52 {strides = array<i32>} : memref<72x256xf32, #tpu.memory_space<vmem>>, vector<8x256xf32>,
    %54 = vector.extract_strided_slice %7 {offsets = [0, 16], sizes = [8, 240], strides = [1, 1]} : vector<8x256xf32> to vector<8x240xf32>
    %cst_32 = arith.constant 0.000000e+00 : f32
    %55 = vector.broadcast %cst_32 : f32 to vector<8x16xf32>
    %56 = tpu.concatenate %54, %55 in 1 : vector<8x240xf32>, vector<8x16xf32> -> vector<8x256xf32>
    %c7 = arith.constant 7 : index
    %c0_33 = arith.constant 0 : index
    %57 = vector.load %arg2[%c7, %c0_33] : memref<16x256xf32, #tpu.memory_space<vmem>>, vector<1x256xf32>
    %58 = vector.broadcast %57 : vector<1x256xf32> to vector<8x256xf32>
    %59 = arith.mulf %56, %58 : vector<8x256xf32>
    %c56 = arith.constant 56 : index
    %c0_34 = arith.constant 0 : index
    %60 = vector.load %arg7[%c56, %c0_34] : memref<72x256xf32, #tpu.memory_space<vmem>>, vector<8x256xf32>
    tpu.vector_store %arg7[%c56, %c0_34], %59 {strides = array<i32>} : memref<72x256xf32, #tpu.memory_space<vmem>>, vector<8x256xf32>,
    %61 = vector.extract_strided_slice %7 {offsets = [0, 17], sizes = [8, 239], strides = [1, 1]} : vector<8x256xf32> to vector<8x239xf32>
    %cst_35 = arith.constant 0.000000e+00 : f32
    %62 = vector.broadcast %cst_35 : f32 to vector<8x17xf32>
    %63 = tpu.concatenate %61, %62 in 1 : vector<8x239xf32>, vector<8x17xf32> -> vector<8x256xf32>
    %c8_36 = arith.constant 8 : index
    %c0_37 = arith.constant 0 : index
    %64 = vector.load %arg2[%c8_36, %c0_37] : memref<16x256xf32, #tpu.memory_space<vmem>>, vector<1x256xf32>
    %65 = vector.broadcast %64 : vector<1x256xf32> to vector<8x256xf32>
    %66 = arith.mulf %63, %65 : vector<8x256xf32>
    %c64 = arith.constant 64 : index
    %c0_38 = arith.constant 0 : index
    %67 = vector.load %arg7[%c64, %c0_38] : memref<72x256xf32, #tpu.memory_space<vmem>>, vector<8x256xf32>
    tpu.vector_store %arg7[%c64, %c0_38], %66 {strides = array<i32>} : memref<72x256xf32, #tpu.memory_space<vmem>>, vector<8x256xf32>,
    %c0_39 = arith.constant 0 : index
    %c0_40 = arith.constant 0 : index
    %68 = vector.load %arg3[%c0_39, %c0_40] : memref<8x72xf32, #tpu.memory_space<vmem>>, vector<8x72xf32>
    %c0_41 = arith.constant 0 : index
    %c0_42 = arith.constant 0 : index
    %69 = vector.load %arg7[%c0_41, %c0_42] : memref<72x256xf32, #tpu.memory_space<vmem>>, vector<72x256xf32>
    %cst_43 = arith.constant dense<0.000000e+00> : vector<8x256xf32>
    %70 = tpu.matmul %68, %69, %cst_43 {dimension_numbers = #tpu.dot_dimension_numbers<[1], [0], [0], [1], [0, 0, 1, 1], [], []>} : vector<8x72xf32>, vector<72x256xf32>, vector<8x256xf32> -> vector<8x256xf32>
    %c0_44 = arith.constant 0 : index
    %c0_45 = arith.constant 0 : index
    %c0_46 = arith.constant 0 : index
    %71 = vector.load %arg4[%c0_44, %c0_45, %c0_46] : memref<1x8x256xf32, #tpu.memory_space<vmem>>, vector<1x8x256xf32>
    %72 = vector.shape_cast %71 : vector<1x8x256xf32> to vector<8x256xf32>
    %73 = vector.shape_cast %70 : vector<8x256xf32> to vector<1x8x256xf32>
    tpu.vector_store %arg4[%c0_44, %c0_45, %c0_46], %73 {strides = array<i32>} : memref<1x8x256xf32, #tpu.memory_space<vmem>>, vector<1x8x256xf32>,
    %cst_47 = arith.constant dense<0.000000e+00> : vector<8xf32>
    %74 = vector.multi_reduction <add>, %70, %cst_47 [1] : vector<8x256xf32> to vector<8xf32>
    %75 = vector.shape_cast %74 : vector<8xf32> to vector<8x1xf32>
    %76 = arith.addf %2, %75 : vector<8x1xf32>
    %77 = arith.mulf %70, %70 : vector<8x256xf32>
    %cst_48 = arith.constant dense<0.000000e+00> : vector<8xf32>
    %78 = vector.multi_reduction <add>, %77, %cst_48 [1] : vector<8x256xf32> to vector<8xf32>
    %79 = vector.shape_cast %78 : vector<8xf32> to vector<8x1xf32>
    %80 = arith.addf %3, %79 : vector<8x1xf32>
    %81 = tpu.concatenate %76, %80 in 1 : vector<8x1xf32>, vector<8x1xf32> -> vector<8x2xf32>
    %c0_49 = arith.constant 0 : index
    %c0_50 = arith.constant 0 : index
    %c0_51 = arith.constant 0 : index
    %82 = vector.load %arg5[%c0_49, %c0_50, %c0_51] : memref<1x8x2xf32, #tpu.memory_space<vmem>>, vector<1x8x2xf32>
    %83 = vector.shape_cast %82 : vector<1x8x2xf32> to vector<8x2xf32>
    %84 = vector.shape_cast %81 : vector<8x2xf32> to vector<1x8x2xf32>
    tpu.vector_store %arg5[%c0_49, %c0_50, %c0_51], %84 {strides = array<i32>} : memref<1x8x2xf32, #tpu.memory_space<vmem>>, vector<1x8x2xf32>,
    return
  }
  func.func @transform_0(%arg0: i32) -> (i32, i32, i32) {
    %c0_i32 = arith.constant 0 : i32
    %c0_i32_0 = arith.constant 0 : i32
    %c0_i32_1 = arith.constant 0 : i32
    return %arg0, %c0_i32, %c0_i32_0 : i32, i32, i32
  }
  func.func @transform_1(%arg0: i32) -> (i32, i32) {
    %c0_i32 = arith.constant 0 : i32
    %c0_i32_0 = arith.constant 0 : i32
    %c0_i32_1 = arith.constant 0 : i32
    return %c0_i32, %c0_i32_0 : i32, i32
  }
  func.func @transform_2(%arg0: i32) -> (i32, i32) {
    %c0_i32 = arith.constant 0 : i32
    %c0_i32_0 = arith.constant 0 : i32
    %c0_i32_1 = arith.constant 0 : i32
    return %c0_i32, %c0_i32_0 : i32, i32
  }
  func.func @transform_3(%arg0: i32) -> (i32, i32, i32) {
    %c0_i32 = arith.constant 0 : i32
    %c0_i32_0 = arith.constant 0 : i32
    %c0_i32_1 = arith.constant 0 : i32
    return %arg0, %c0_i32, %c0_i32_0 : i32, i32, i32
  }
  func.func @transform_4(%arg0: i32) -> (i32, i32, i32) {
    %c0_i32 = arith.constant 0 : i32
    %c0_i32_0 = arith.constant 0 : i32
    %c0_i32_1 = arith.constant 0 : i32
    return %arg0, %c0_i32, %c0_i32_0 : i32, i32, i32
  }
}

</mosaic_0001>

<llo_original>
// kernel: tpu_custom_call.1
$region0: #{tpu_custom_call.1}
  #allocation0 [shape = 'u32[]', space=smem, size = 0x4, offset = 0x4, fixed_abs, tag = 'smem constant byte address 0x4 - core index']
  #allocation1 [shape = 'u32[72,128]{1,0:T(1,128)}', space=vmem, size = 0x9000, scoped, tag = 'internal scratch']
  #allocation2 [shape = 'f32[8,256]{1,0:T(8,128)}', space=vmem, size = 0x2000, scoped, tag = 'scratch operand']
  #allocation3 [shape = 'f32[72,256]{1,0:T(8,128)}', space=vmem, size = 0x12000, scoped, tag = 'scratch operand']
  %s0 = inlined_call_operand.hbm [shape: f32[2,4,256], index: 0, kind: input, shape index: {}]
  %s1 = inlined_call_operand.hbm [shape: f32[16,256], index: 1, kind: input, shape index: {}]
  %s2 = inlined_call_operand.hbm [shape: f32[8,72], index: 2, kind: input, shape index: {}]
  %s3 = inlined_call_operand.hbm [shape: f32[2,8,256], index: 3, kind: output, shape index: {0}]
  %s4 = inlined_call_operand.vmem [shape: f32[2,8,2], index: 4, kind: output, shape index: {1}]
  %5 = xla_tuple %s3, %s4
  %s6 = sld [smem:[#allocation0]]
  $region65: #{tpu_custom_call.1} parent=0
    _
  %s8 = ssub.s32 1, %s6
  %s9 = scalar_select 0, %s8, %s6
  $region1: #{tpu_custom_call.1} parent=0
    #allocation4 [shape = 'u8[8192]{0}', space=vmem, size = 0x2000, scoped, tag = 'input window, operand 0']
    #allocation5 [shape = 's32[2]{0}', space=sflag, size = 0x8, scoped, tag = 'scoped memory for tpu_custom_call.1']
    #allocation6 [shape = 's32[2]{0}', space=sflag, size = 0x8, scoped, tag = 'scoped memory for tpu_custom_call.1']
    #allocation7 [shape = 'u8[16384]{0}', space=vmem, size = 0x4000, scoped, tag = 'input window, operand 1, single buffered']
    #allocation8 [shape = 's32[1]{0}', space=sflag, size = 0x4, scoped, tag = 'scoped memory for tpu_custom_call.1']
    #allocation9 [shape = 'u8[4096]{0}', space=vmem, size = 0x1000, scoped, tag = 'input window, operand 2, single buffered']
    #allocation10 [shape = 'u8[16384]{0}', space=vmem, size = 0x4000, scoped, tag = 'output window, operand 0']
    %10 = vsyncpa [#allocation5], 0
    %s11 = scalar_lea.sflag [#allocation5], 1
    %12 = vsyncpa %s11, 0
    %13 = vsyncpa [#allocation8], 0
    %14 = vsyncpa [#allocation6], 0
    %s15 = scalar_lea.sflag [#allocation6], 1
    %16 = vsyncpa %s15, 0
    loop: start=0, step=1, limit=4
    $region2: #{tpu_custom_call.1} parent=1 // loop_pre_header
      _
    $region3: #{tpu_custom_call.1} parent=1 // loop_header
      %s18 = sphi 0, %s22
      %p19 = scmp.ge.s32.totalorder %s18, 4
      %s28 = sphi 0, %s30
      %s31 = sphi 0, %s28
      %s32 = sphi 0, %s31
      %s48 = sphi 0, %s32
      %s52 = sphi 0, %s52
      %s54 = sphi 0, %s52
      %s55 = sphi 0, %s54
      %s69 = sphi 0, %s55
      %s73 = sphi 0, %s73
      %s75 = sphi 0, %s73
      %s76 = sphi 0, %s75
      %s90 = sphi 0, %s76
      %s96 = sphi 0, %s98
      %s99 = sphi 0, %s96
      %s100 = sphi 0, %s99
      %s116 = sphi 0, %s100
      %s122 = sphi 0, %s124
      %s125 = sphi 0, %s122
      %s126 = sphi 0, %s125
      %s142 = sphi 0, %s126
    $region4: #{tpu_custom_call.1} parent=1 // loop_header_branch
      %21 = sbr.rel (%p19) target = $region8
    $region5: #{tpu_custom_call.1} parent=1 // loop_body
      %s23 = ssub.s32 %s18, 1
      %s24 = ssub.s32 %s18, 2
      %s25 = sadd.s32 %s18, 1
      %s26 = ssub.s32 %s18, %s25
      %p27 = scmp.eq.s32.totalorder %s26, 0
      %s29 = sadd.s32 %s28, 1
      %s30 = scalar_select %p27, %s28, %s29
      %p33 = pneg %p27
      %p34 = scmp.eq.s32.totalorder %s18, 1
      %p35 = por %p33, %p34
      %p36 = scmp.ne.s32.totalorder %s28, %s31
      %p37 = scmp.eq.s32.totalorder %s18, 0
      %p38 = por %p36, %p37
      %p39 = scmp.ne.s32.totalorder %s28, %s31
      %p40 = scmp.eq.s32.totalorder %s23, 1
      %p41 = por %p39, %p40
      %p42 = scmp.ne.s32.totalorder %s31, %s32
      %p43 = scmp.eq.s32.totalorder %s23, 0
      %p44 = por %p42, %p43
      %p45 = scmp.ne.s32.totalorder %s31, %s32
      %p46 = scmp.eq.s32.totalorder %s24, 1
      %p47 = por %p45, %p46
      %p49 = scmp.ne.s32.totalorder %s32, %s48
      %p50 = scmp.eq.s32.totalorder %s24, 0
      %p51 = por %p49, %p50
      %s53 = sadd.s32 %s52, 1
      %p56 = scmp.eq.s32.totalorder %s18, 1
      %p57 = scmp.ne.s32.totalorder %s52, %s54
      %p58 = scmp.eq.s32.totalorder %s18, 0
      %p59 = por %p57, %p58
      %p60 = scmp.ne.s32.totalorder %s52, %s54
      %p61 = scmp.eq.s32.totalorder %s23, 1
      %p62 = por %p60, %p61
      %p63 = scmp.ne.s32.totalorder %s54, %s55
      %p64 = scmp.eq.s32.totalorder %s23, 0
      %p65 = por %p63, %p64
      %p66 = scmp.ne.s32.totalorder %s54, %s55
      %p67 = scmp.eq.s32.totalorder %s24, 1
      %p68 = por %p66, %p67
      %p70 = scmp.ne.s32.totalorder %s55, %s69
      %p71 = scmp.eq.s32.totalorder %s24, 0
      %p72 = por %p70, %p71
      %s74 = sadd.s32 %s73, 1
      %p77 = scmp.eq.s32.totalorder %s18, 1
      %p78 = scmp.ne.s32.totalorder %s73, %s75
      %p79 = scmp.eq.s32.totalorder %s18, 0
      %p80 = por %p78, %p79
      %p81 = scmp.ne.s32.totalorder %s73, %s75
      %p82 = scmp.eq.s32.totalorder %s23, 1
      %p83 = por %p81, %p82
      %p84 = scmp.ne.s32.totalorder %s75, %s76
      %p85 = scmp.eq.s32.totalorder %s23, 0
      %p86 = por %p84, %p85
      %p87 = scmp.ne.s32.totalorder %s75, %s76
      %p88 = scmp.eq.s32.totalorder %s24, 1
      %p89 = por %p87, %p88
      %p91 = scmp.ne.s32.totalorder %s76, %s90
      %p92 = scmp.eq.s32.totalorder %s24, 0
      %p93 = por %p91, %p92
      %s94 = ssub.s32 %s18, %s25
      %p95 = scmp.eq.s32.totalorder %s94, 0
      %s97 = sadd.s32 %s96, 1
      %s98 = scalar_select %p95, %s96, %s97
      %p101 = pneg %p95
      %p102 = scmp.eq.s32.totalorder %s18, 1
      %p103 = por %p101, %p102
      %p104 = scmp.ne.s32.totalorder %s96, %s99
      %p105 = scmp.eq.s32.totalorder %s18, 0
      %p106 = por %p104, %p105
      %p107 = scmp.ne.s32.totalorder %s96, %s99
      %p108 = scmp.eq.s32.totalorder %s23, 1
      %p109 = por %p107, %p108
      %p110 = scmp.ne.s32.totalorder %s99, %s100
      %p111 = scmp.eq.s32.totalorder %s23, 0
      %p112 = por %p110, %p111
      %p113 = scmp.ne.s32.totalorder %s99, %s100
      %p114 = scmp.eq.s32.totalorder %s24, 1
      %p115 = por %p113, %p114
      %p117 = scmp.ne.s32.totalorder %s100, %s116
      %p118 = scmp.eq.s32.totalorder %s24, 0
      %p119 = por %p117, %p118
      %s120 = ssub.s32 %s18, %s25
      %p121 = scmp.eq.s32.totalorder %s120, 0
      %s123 = sadd.s32 %s122, 1
      %s124 = scalar_select %p121, %s122, %s123
      %p127 = pneg %p121
      %p128 = scmp.eq.s32.totalorder %s18, 1
      %p129 = por %p127, %p128
      %p130 = scmp.ne.s32.totalorder %s122, %s125
      %p131 = scmp.eq.s32.totalorder %s18, 0
      %p132 = por %p130, %p131
      %p133 = scmp.ne.s32.totalorder %s122, %s125
      %p134 = scmp.eq.s32.totalorder %s23, 1
      %p135 = por %p133, %p134
      %p136 = scmp.ne.s32.totalorder %s125, %s126
      %p137 = scmp.eq.s32.totalorder %s23, 0
      %p138 = por %p136, %p137
      %p139 = scmp.ne.s32.totalorder %s125, %s126
      %p140 = scmp.eq.s32.totalorder %s24, 1
      %p141 = por %p139, %p140
      %p143 = scmp.ne.s32.totalorder %s126, %s142
      %p144 = scmp.eq.s32.totalorder %s24, 0
      %p145 = por %p143, %p144
      %p146 = scmp.le.s32.totalorder 1, %s18
      %p147 = scmp.lt.s32.totalorder %s18, 3
      %p148 = pnand %p146, %p147
      %p149 = pneg %p148
      // Predicated region
      $region9: #{tpu_custom_call.1} parent=5 // pred_check
        _
      $region10: #{tpu_custom_call.1} parent=5 // pred_check_branch
        %151 = sbr.rel (%p148) target = $region12
      $region11: #{tpu_custom_call.1} parent=5 // pred_region
        %s152 = ssub.s32 %s18, 1
        // Predicated region
        $region13: #{tpu_custom_call.1} parent=11 // pred_check
          %p153 = pneg %p65
        $region14: #{tpu_custom_call.1} parent=11 // pred_check_branch
          %155 = sbr.rel (%p153) target = $region16
        $region15: #{tpu_custom_call.1} parent=11 // pred_region
          %157 = vsyncadd [#allocation8], 0
          %s158 = sshll.u32 %s1, 4
          %s159 = int_to_ptr.hbm [resolvable:$true] %s158
          %s160 = sshll.u32 [#allocation7], 4
          %s161 = int_to_ptr.vmem [resolvable:$true] %s160
          %166 = dma.hbm_to_vmem [thread:$0]  %s159, 512, %s161, [#allocation8], 256, 256, 16
        $region16: #{tpu_custom_call.1} parent=11 // pred_fallthru
          _
        // Predicated region
        $region17: #{tpu_custom_call.1} parent=11 // pred_check
          %p167 = pneg %p86
        $region18: #{tpu_custom_call.1} parent=11 // pred_check_branch
          %169 = sbr.rel (%p167) target = $region20
        $region19: #{tpu_custom_call.1} parent=11 // pred_region
          %171 = vsyncadd [#allocation8], 0
          %s173 = sshll.u32 %s2, 4
          %s174 = int_to_ptr.hbm [resolvable:$true] %s173
          %s175 = sshll.u32 [#allocation9], 4
          %s176 = int_to_ptr.vmem [resolvable:$true] %s175
          %178 = dma.hbm_to_vmem [thread:$0]  %s174, 128, %s176, [#allocation8]
        $region20: #{tpu_custom_call.1} parent=11 // pred_fallthru
          _
      $region12: #{tpu_custom_call.1} parent=5 // pred_fallthru
        _
      %p179 = scmp.lt.s32.totalorder %s18, 2
      // Predicated region
      $region21: #{tpu_custom_call.1} parent=5 // pred_check
        %p180 = pneg %p179
      $region22: #{tpu_custom_call.1} parent=5 // pred_check_branch
        %182 = sbr.rel (%p180) target = $region24
      $region23: #{tpu_custom_call.1} parent=5 // pred_region
        // Predicated region
        $region25: #{tpu_custom_call.1} parent=23 // pred_check
          %p183 = pneg %p38
        $region26: #{tpu_custom_call.1} parent=23 // pred_check_branch
          %185 = sbr.rel (%p183) target = $region28
        $region27: #{tpu_custom_call.1} parent=23 // pred_region
          %s186 = sand.u32 %s28, 1
          %s187 = scalar_lea.sflag [#allocation5], %s186
          %s188 = sand.u32 %s28, 1
          %s189 = smul.addr %s188, 8
          %s190 = scalar_lea.vmem [#allocation4], %s189
          %192 = vsyncadd %s187, 0
          %s193 = smul.addr %s18, 2
          %s194 = smul.addr %s193, 4
          %s195 = scalar_lea.hbm %s0, %s194
          %s197 = sshll.u32 %s195, 4
          %s198 = int_to_ptr.hbm [resolvable:$true] %s197
          %s199 = sshll.u32 %s190, 4
          %s200 = int_to_ptr.vmem [resolvable:$true] %s199
          %202 = dma.hbm_to_vmem [thread:$0]  %s198, 128, %s200, %s187
        $region28: #{tpu_custom_call.1} parent=23 // pred_fallthru
          _
      $region24: #{tpu_custom_call.1} parent=5 // pred_fallthru
        _
      %p203 = scmp.le.s32.totalorder 1, %s18
      %p204 = scmp.lt.s32.totalorder %s18, 3
      %p205 = pnand %p203, %p204
      %p206 = pneg %p205
      // Predicated region
      $region29: #{tpu_custom_call.1} parent=5 // pred_check
        _
      $region30: #{tpu_custom_call.1} parent=5 // pred_check_branch
        %208 = sbr.rel (%p205) target = $region32
      $region31: #{tpu_custom_call.1} parent=5 // pred_region
        %s209 = ssub.s32 %s18, 1
        %s210 = sand.u32 %s31, 1
        %s211 = scalar_lea.sflag [#allocation5], %s210
        %s212 = sand.u32 %s31, 1
        %s213 = smul.addr %s212, 8
        %s214 = scalar_lea.vmem [#allocation4], %s213
        // Predicated region
        $region33: #{tpu_custom_call.1} parent=31 // pred_check
          %p215 = pneg %p44
        $region34: #{tpu_custom_call.1} parent=31 // pred_check_branch
          %217 = sbr.rel (%p215) target = $region36
        $region35: #{tpu_custom_call.1} parent=31 // pred_region
          %219 = dma.done %s211, 128
        $region36: #{tpu_custom_call.1} parent=31 // pred_fallthru
          _
        // Predicated region
        $region37: #{tpu_custom_call.1} parent=31 // pred_check
          %p220 = pneg %p65
        $region38: #{tpu_custom_call.1} parent=31 // pred_check_branch
          %222 = sbr.rel (%p220) target = $region40
        $region39: #{tpu_custom_call.1} parent=31 // pred_region
          %224 = dma.done [#allocation8], 512
        $region40: #{tpu_custom_call.1} parent=31 // pred_fallthru
          _
        // Predicated region
        $region41: #{tpu_custom_call.1} parent=31 // pred_check
          %p225 = pneg %p86
        $region42: #{tpu_custom_call.1} parent=31 // pred_check_branch
          %227 = sbr.rel (%p225) target = $region44
        $region43: #{tpu_custom_call.1} parent=31 // pred_region
          %229 = dma.done [#allocation8], 128
        $region44: #{tpu_custom_call.1} parent=31 // pred_fallthru
          _
        %s230 = sand.u32 %s31, 1
        %s231 = scalar_lea.sflag [#allocation5], %s230
        %s232 = sand.u32 %s31, 1
        %s233 = smul.addr %s232, 8
        %s234 = scalar_lea.vmem [#allocation4], %s233
        %p235 = pneg %p44
        %p236 = pneg %p41
        %p237 = pneg %p65
        %p238 = pneg %p62
        %p239 = pneg %p86
        %p240 = pneg %p83
        %p241 = pneg %p112
        %p242 = pneg %p109
        %s243 = sand.u32 %s99, 1
        %s244 = scalar_lea.sflag [#allocation6], %s243
        %s245 = sand.u32 %s99, 1
        %s246 = smul.addr %s245, 16
        %s247 = scalar_lea.vmem [#allocation10], %s246
        %p248 = pneg %p138
        %p249 = pneg %p135
        %p250 = scmp.lt.s32.totalorder %s23, 1
        %s251 = scalar_select %p250, %s23, 1
        %s252 = smul.addr %s251, 8
        %s253 = scalar_lea.vmem %s4, %s252
        %p254 = scmp.lt.s32.totalorder %s23, 1
        %s255 = scalar_select %p254, %s23, 1
        %s256 = smul.addr %s255, 8
        %s257 = scalar_lea.vmem %s4, %s256
        %258 = vst [vmem:[#allocation2] sm:$0xf0] 0.0
        %259 = vst [vmem:[#allocation2 + $0x8] sm:$0xf0] 0.0
        %v260 = vld [vmem:[%s214] sm:$0xff]
        %262 = vst [vmem:[#allocation1] ss:$2 sm:$0xff] %v260
        %v263 = vld.sshfl [vmem:[#allocation1] sm:$0xff pattern:$0x75316420]
        %v264 = vld.sshfl [vmem:[#allocation1 + $0x8] sm:$0xff pattern:$0x75316420]
        %267 = vst [vmem:[#allocation2] sm:$0xf] %v263
        %268 = vst [vmem:[#allocation2 + $0x8] sm:$0xf] %v264
        %v269 = vld [vmem:[#allocation2] sm:$0xff]
        %v270 = vld [vmem:[#allocation2 + $0x8] sm:$0xff]
        %273 = vrot.lane.b32.xlu0 %v269, 17
        %v274 = vpop.permute.xlu0 %273
        %275 = vrot.lane.b32.xlu0 %v270, 17
        %v276 = vpop.permute.xlu0 %275
        %vm277 = vcmask 138240
        %v278 = vsel %vm277, %v274, %v276
        %v281 = vsel %vm277, 0.0, %v274
        %v282 = vld [vmem:[#allocation7] ss:$8 sm:$0x3]
        %v284 = vperm.slane %v282, 0
        %v285 = vperm.slane %v282, 1
        %v288 = vmul.f32 %v281, %v284
        %v289 = vmul.f32 %v278, %v285
        %290 = vst [vmem:[#allocation3] sm:$0xff] %v288
        %291 = vst [vmem:[#allocation3 + $0x8] sm:$0xff] %v289
        %292 = vrot.lane.b32.xlu0 %v269, 16
        %v293 = vpop.permute.xlu0 %292
        %294 = vrot.lane.b32.xlu0 %v270, 16
        %v295 = vpop.permute.xlu0 %294
        %vm296 = vcmask 130048
        %v297 = vsel %vm296, %v293, %v295
        %v300 = vsel %vm296, 0.0, %v293
        %s301 = scalar_lea.vmem [#allocation7], 1
        %v302 = vld [vmem:[%s301] ss:$8 sm:$0x3]
        %v304 = vperm.slane %v302, 0
        %v305 = vperm.slane %v302, 1
        %v308 = vmul.f32 %v300, %v304
        %v309 = vmul.f32 %v297, %v305
        %310 = vst [vmem:[#allocation3 + $0x10] sm:$0xff] %v308
        %311 = vst [vmem:[#allocation3 + $0x18] sm:$0xff] %v309
        %312 = vrot.lane.b32.xlu0 %v269, 15
        %v313 = vpop.permute.xlu0 %312
        %314 = vrot.lane.b32.xlu0 %v270, 15
        %v315 = vpop.permute.xlu0 %314
        %vm316 = vcmask 121856
        %v317 = vsel %vm316, %v313, %v315
        %v320 = vsel %vm316, 0.0, %v313
        %s321 = scalar_lea.vmem [#allocation7], 2
        %v322 = vld [vmem:[%s321] ss:$8 sm:$0x3]
        %v324 = vperm.slane %v322, 0
        %v325 = vperm.slane %v322, 1
        %v328 = vmul.f32 %v320, %v324
        %v329 = vmul.f32 %v317, %v325
        %330 = vst [vmem:[#allocation3 + $0x20] sm:$0xff] %v328
        %331 = vst [vmem:[#allocation3 + $0x28] sm:$0xff] %v329
        %332 = vrot.lane.b32.xlu0 %v269, 1
        %v333 = vpop.permute.xlu0 %332
        %334 = vrot.lane.b32.xlu0 %v270, 1
        %v335 = vpop.permute.xlu0 %334
        %vm336 = vcmask 7168
        %v337 = vsel %vm336, %v333, %v335
        %v340 = vsel %vm336, 0.0, %v333
        %s341 = scalar_lea.vmem [#allocation7], 3
        %v342 = vld [vmem:[%s341] ss:$8 sm:$0x3]
        %v344 = vperm.slane %v342, 0
        %v345 = vperm.slane %v342, 1
        %v348 = vmul.f32 %v340, %v344
        %v349 = vmul.f32 %v337, %v345
        %350 = vst [vmem:[#allocation3 + $0x30] sm:$0xff] %v348
        %351 = vst [vmem:[#allocation3 + $0x38] sm:$0xff] %v349
        %s352 = scalar_lea.vmem [#allocation7], 4
        %v353 = vld [vmem:[%s352] ss:$8 sm:$0x3]
        %v355 = vperm.slane %v353, 0
        %v356 = vperm.slane %v353, 1
        %v359 = vmul.f32 %v269, %v355
        %v360 = vmul.f32 %v270, %v356
        %361 = vst [vmem:[#allocation3 + $0x40] sm:$0xff] %v359
        %362 = vst [vmem:[#allocation3 + $0x48] sm:$0xff] %v360
        %363 = vrot.lane.b32.xlu0 %v269, 127
        %v364 = vpop.permute.xlu0 %363
        %365 = vrot.lane.b32.xlu0 %v270, 127
        %v366 = vpop.permute.xlu0 %365
        %vm367 = vcmask 1039360
        %v368 = vsel %vm367, %v364, %v366
        %v371 = vsel %vm367, %v366, 0.0
        %s372 = scalar_lea.vmem [#allocation7], 5
        %v373 = vld [vmem:[%s372] ss:$8 sm:$0x3]
        %v375 = vperm.slane %v373, 0
        %v376 = vperm.slane %v373, 1
        %v379 = vmul.f32 %v368, %v375
        %v380 = vmul.f32 %v371, %v376
        %381 = vst [vmem:[#allocation3 + $0x50] sm:$0xff] %v379
        %382 = vst [vmem:[#allocation3 + $0x58] sm:$0xff] %v380
        %383 = vrot.lane.b32.xlu0 %v269, 113
        %v384 = vpop.permute.xlu0 %383
        %385 = vrot.lane.b32.xlu0 %v270, 113
        %v386 = vpop.permute.xlu0 %385
        %vm387 = vcmask 924672
        %v388 = vsel %vm387, %v384, %v386
        %v391 = vsel %vm387, %v386, 0.0
        %s392 = scalar_lea.vmem [#allocation7], 6
        %v393 = vld [vmem:[%s392] ss:$8 sm:$0x3]
        %v395 = vperm.slane %v393, 0
        %v396 = vperm.slane %v393, 1
        %v399 = vmul.f32 %v388, %v395
        %v400 = vmul.f32 %v391, %v396
        %401 = vst [vmem:[#allocation3 + $0x60] sm:$0xff] %v399
        %402 = vst [vmem:[#allocation3 + $0x68] sm:$0xff] %v400
        %403 = vrot.lane.b32.xlu0 %v269, 112
        %v404 = vpop.permute.xlu0 %403
        %405 = vrot.lane.b32.xlu0 %v270, 112
        %v406 = vpop.permute.xlu0 %405
        %vm407 = vcmask 916480
        %v408 = vsel %vm407, %v404, %v406
        %v411 = vsel %vm407, %v406, 0.0
        %s412 = scalar_lea.vmem [#allocation7], 7
        %v413 = vld [vmem:[%s412] ss:$8 sm:$0x3]
        %v415 = vperm.slane %v413, 0
        %v416 = vperm.slane %v413, 1
        %v419 = vmul.f32 %v408, %v415
        %v420 = vmul.f32 %v411, %v416
        %421 = vst [vmem:[#allocation3 + $0x70] sm:$0xff] %v419
        %422 = vst [vmem:[#allocation3 + $0x78] sm:$0xff] %v420
        %423 = vrot.lane.b32.xlu0 %v269, 111
        %v424 = vpop.permute.xlu0 %423
        %425 = vrot.lane.b32.xlu0 %v270, 111
        %v426 = vpop.permute.xlu0 %425
        %vm427 = vcmask 908288
        %v428 = vsel %vm427, %v424, %v426
        %v431 = vsel %vm427, %v426, 0.0
        %s432 = scalar_lea.vmem [#allocation7], 16
        %v433 = vld [vmem:[%s432] ss:$8 sm:$0x3]
        %v435 = vperm.slane %v433, 0
        %v436 = vperm.slane %v433, 1
        %v439 = vmul.f32 %v428, %v435
        %v440 = vmul.f32 %v431, %v436
        %441 = vst [vmem:[#allocation3 + $0x80] sm:$0xff] %v439
        %442 = vst [vmem:[#allocation3 + $0x88] sm:$0xff] %v440
        %v443 = vld [vmem:[#allocation9] sm:$0xff]
        %v444 = vld [vmem:[#allocation3] sm:$0xff]
        %v445 = vld [vmem:[#allocation3 + $0x8] sm:$0xff]
        %v446 = vld [vmem:[#allocation3 + $0x10] sm:$0xff]
        %v447 = vld [vmem:[#allocation3 + $0x18] sm:$0xff]
        %v448 = vld [vmem:[#allocation3 + $0x20] sm:$0xff]
        %v449 = vld [vmem:[#allocation3 + $0x28] sm:$0xff]
        %v450 = vld [vmem:[#allocation3 + $0x30] sm:$0xff]
        %v451 = vld [vmem:[#allocation3 + $0x38] sm:$0xff]
        %v452 = vld [vmem:[#allocation3 + $0x40] sm:$0xff]
        %v453 = vld [vmem:[#allocation3 + $0x48] sm:$0xff]
        %v454 = vld [vmem:[#allocation3 + $0x50] sm:$0xff]
        %v455 = vld [vmem:[#allocation3 + $0x58] sm:$0xff]
        %v456 = vld [vmem:[#allocation3 + $0x60] sm:$0xff]
        %v457 = vld [vmem:[#allocation3 + $0x68] sm:$0xff]
        %v458 = vld [vmem:[#allocation3 + $0x70] sm:$0xff]
        %v459 = vld [vmem:[#allocation3 + $0x78] sm:$0xff]
        %v460 = vld [vmem:[#allocation3 + $0x80] sm:$0xff]
        %v461 = vld [vmem:[#allocation3 + $0x88] sm:$0xff]
        %vm462 = vcmask 588800
        %v464 = vsel %vm462, %v443, 0
        %466 = vmatpush.msra.mxu0 0.0
        %467 = vmatpush.msra.mxu0 0.0
        %468 = vmatpush.msra.mxu0 0.0
        %469 = vmatpush.msra.mxu0 0.0
        %470 = vmatpush.msra.mxu0 0.0
        %471 = vmatpush.msra.mxu0 0.0
        %472 = vmatpush.msra.mxu0 0.0
        %473 = vmatpush.msra.mxu0 %v460
        %474 = vmatpush.msra.mxu0 %v458
        %475 = vmatpush.msra.mxu0 %v456
        %476 = vmatpush.msra.mxu0 %v454
        %477 = vmatpush.msra.mxu0 %v452
        %478 = vmatpush.msra.mxu0 %v450
        %479 = vmatpush.msra.mxu0 %v448
        %480 = vmatpush.msra.mxu0 %v446
        %481 = vmatpush.msra.mxu0 %v444
        %482 = vmatmul.f32.gmra.mxu0 %v464
        %v483 = vpop.f32.mrf.mxu0
        %v484 = vadd.f32 0.0, %v483
        %485 = vdwg.mxu0
        %486 = vmatpush.msra.mxu0 0.0
        %487 = vmatpush.msra.mxu0 0.0
        %488 = vmatpush.msra.mxu0 0.0
        %489 = vmatpush.msra.mxu0 0.0
        %490 = vmatpush.msra.mxu0 0.0
        %491 = vmatpush.msra.mxu0 0.0
        %492 = vmatpush.msra.mxu0 0.0
        %493 = vmatpush.msra.mxu0 %v461
        %494 = vmatpush.msra.mxu0 %v459
        %495 = vmatpush.msra.mxu0 %v457
        %496 = vmatpush.msra.mxu0 %v455
        %497 = vmatpush.msra.mxu0 %v453
        %498 = vmatpush.msra.mxu0 %v451
        %499 = vmatpush.msra.mxu0 %v449
        %500 = vmatpush.msra.mxu0 %v447
        %501 = vmatpush.msra.mxu0 %v445
        %502 = vmatmul.f32.gmra.mxu0 %v464
        %v503 = vpop.f32.mrf.mxu0
        %v504 = vadd.f32 0.0, %v503
        %505 = vdwg.mxu0
        %506 = vst [vmem:[%s247] sm:$0xff] %v484
        %507 = vst [vmem:[%s247 + $0x8] sm:$0xff] %v504
        %v508 = vadd.f32 %v484, %v504
        %509 = vadd.xlane.f32.xlu0 %v508
        %v510 = vpop.xlane.xlu0 %509
        %v511 = vadd.f32 %v510, 0.0
        %v512 = vmul.f32 %v484, %v484
        %v513 = vmul.f32 %v504, %v504
        %v514 = vadd.f32 %v512, %v513
        %515 = vadd.xlane.f32.xlu0 %v514
        %v516 = vpop.xlane.xlu0 %515
        %v517 = vadd.f32 %v516, 0.0
        %v518 = vsel %vm336, %v511, %v517
        %vm519 = vcmask 15360
        %520 = vst.msk [vmem:[%s257] sm:$0xff] %vm519, %v518
        %s521 = sand.u32 %s99, 1
        %s522 = scalar_lea.sflag [#allocation6], %s521
        %s523 = sand.u32 %s99, 1
        %s524 = smul.addr %s523, 16
        %s525 = scalar_lea.vmem [#allocation10], %s524
        %p526 = scmp.lt.s32.totalorder %s23, 1
        %s527 = scalar_select %p526, %s23, 1
        %s528 = smul.addr %s527, 8
        %s529 = scalar_lea.vmem %s4, %s528
        // Predicated region
        $region45: #{tpu_custom_call.1} parent=31 // pred_check
          %p530 = pneg %p109
        $region46: #{tpu_custom_call.1} parent=31 // pred_check_branch
          %532 = sbr.rel (%p530) target = $region48
        $region47: #{tpu_custom_call.1} parent=31 // pred_region
          %534 = vsyncadd %s522, 0
          %s535 = smul.addr %s23, 2
          %s536 = smul.addr %s535, 8
          %s537 = scalar_lea.hbm %s3, %s536
          %s539 = sshll.u32 %s525, 4
          %s540 = int_to_ptr.vmem [resolvable:$true] %s539
          %s541 = sshll.u32 %s537, 4
          %s542 = int_to_ptr.hbm [resolvable:$true] %s541
          %544 = dma.vmem_to_hbm [thread:$0]  %s540, 256, %s542, %s522
        $region48: #{tpu_custom_call.1} parent=31 // pred_fallthru
          _
        // Predicated region
        $region49: #{tpu_custom_call.1} parent=31 // pred_check
          %p545 = pneg %p135
        $region50: #{tpu_custom_call.1} parent=31 // pred_check_branch
          %547 = sbr.rel (%p545) target = $region52
        $region51: #{tpu_custom_call.1} parent=31 // pred_region
          _
        $region52: #{tpu_custom_call.1} parent=31 // pred_fallthru
          _
      $region32: #{tpu_custom_call.1} parent=5 // pred_fallthru
        _
      %p548 = scmp.le.s32.totalorder 2, %s18
      // Predicated region
      $region53: #{tpu_custom_call.1} parent=5 // pred_check
        %p549 = pneg %p548
      $region54: #{tpu_custom_call.1} parent=5 // pred_check_branch
        %551 = sbr.rel (%p549) target = $region56
      $region55: #{tpu_custom_call.1} parent=5 // pred_region
        %s552 = ssub.s32 %s18, 2
        // Predicated region
        $region57: #{tpu_custom_call.1} parent=55 // pred_check
          %p553 = pneg %p115
        $region58: #{tpu_custom_call.1} parent=55 // pred_check_branch
          %555 = sbr.rel (%p553) target = $region60
        $region59: #{tpu_custom_call.1} parent=55 // pred_region
          %s556 = sand.u32 %s100, 1
          %s557 = scalar_lea.sflag [#allocation6], %s556
          %s558 = sand.u32 %s100, 1
          %s559 = smul.addr %s558, 16
          %s560 = scalar_lea.vmem [#allocation10], %s559
          %562 = dma.done %s557, 256
        $region60: #{tpu_custom_call.1} parent=55 // pred_fallthru
          _
        // Predicated region
        $region61: #{tpu_custom_call.1} parent=55 // pred_check
          %p563 = pneg %p141
        $region62: #{tpu_custom_call.1} parent=55 // pred_check_branch
          %565 = sbr.rel (%p563) target = $region64
        $region63: #{tpu_custom_call.1} parent=55 // pred_region
          %p566 = scmp.lt.s32.totalorder %s24, 1
          %s567 = scalar_select %p566, %s24, 1
          %s568 = smul.addr %s567, 8
          %s569 = scalar_lea.vmem %s4, %s568
        $region64: #{tpu_custom_call.1} parent=55 // pred_fallthru
          _
      $region56: #{tpu_custom_call.1} parent=5 // pred_fallthru
        _
    $region6: #{tpu_custom_call.1} parent=1 // loop_footer
      %s22 = sadd.s32 1, %s18
    $region7: #{tpu_custom_call.1} parent=1 // loop_footer_branch
      %17 = sbr.rel target = $region3
    $region8: #{tpu_custom_call.1} parent=1 // loop_exit
      _
    %570 = vsyncpa [#allocation5], 1
    %s571 = scalar_lea.sflag [#allocation5], 1
    %572 = vsyncpa %s571, 1
    %573 = vsyncpa [#allocation8], 1
    %574 = vsyncpa [#allocation6], 1
    %s575 = scalar_lea.sflag [#allocation6], 1
    %576 = vsyncpa %s575, 1

</llo_original>
